<compile_context>
chip_gen: v5e
topology: v5e:2x2
jax: 0.10.0
libtpu: 0.0.40
codegen_flags: <defaults>
</compile_context>

<pallas_src>
import functools

import jax
import jax.numpy as jnp
from jax import lax
from jax.experimental import pallas as pl
from jax.experimental.pallas import tpu as pltpu


_VMEM = pl.BlockSpec(memory_space=pltpu.MemorySpace.VMEM)


# ----------------------------- fused kernel ---------------------------------


def grand_fused_kernel(a_hat_ref, dsim_ref, msim_ref, w_d_ref, w_m_ref,
                       w_g1_ref, b_g1_ref, w_g2_ref, b_g2_ref,
                       wd1_c_ref, wd1_f_ref, b_d1_ref,
                       wm1_c_ref, wm1_f_ref, b_m1_ref,
                       w_p_top_ref, w_p_bot_ref, b_p_ref,
                       dis_ref, mir_ref,
                       score_ref,
                       feats_ref,
                       *, order, keep_scale, num_diseases):
    f32 = jnp.float32
    bf16 = jnp.bfloat16

    # Pre-normalized bf16 adjacency (D^{-1/2} A D^{-1/2}), computed once on host.
    a_hat = a_hat_ref[...]                                        # (N, N) bf16

    def prop(x):  # A_hat @ x  (bf16 MXU, f32 accumulate)
        return jnp.dot(a_hat, x.astype(bf16), preferred_element_type=f32)

    # ---- node embeddings: feats = [d_fc(d_sim); m_fc(m_sim)] assembled in a VMEM
    #      scratch from the UNPADDED similarity blocks (bias-free linears) ----
    feats_ref[0:num_diseases, :] = jnp.dot(
        dsim_ref[...], w_d_ref[...], preferred_element_type=f32)   # (nd, hid)
    feats_ref[num_diseases:, :] = jnp.dot(
        msim_ref[...], w_m_ref[...], preferred_element_type=f32)   # (nm, hid)
    feats = feats_ref[...]                                         # (N, hid)

    # ---- GRANDConv with drop_node(eval); keep_scale and 1/(K+1) folded into one
    #      final scale (propagation is linear, applied BEFORE the affine GCN) ----
    x = feats
    acc = feats
    for _ in range(order):          # order is a small compile-time constant
        x = prop(x)
        acc = acc + x
    feat0 = acc * (keep_scale / float(order + 1))                  # (N, hid)

    # ---- 2-layer GCN (GraphConv, no activation); weight applied first so the
    #      narrow class dim keeps the second prop cheap ----
    h1 = prop(jnp.dot(feat0, w_g1_ref[...], preferred_element_type=f32)) + b_g1_ref[...]
    h2 = prop(jnp.dot(h1, w_g2_ref[...], preferred_element_type=f32)) + b_g2_ref[...]

    # ---- log_softmax over classes (f32, never leaves VMEM) ----
    s = h2 - jnp.max(h2, axis=-1, keepdims=True)
    logp = s - jnp.log(jnp.sum(jnp.exp(s), axis=-1, keepdims=True))  # (N, nc)

    # ---- gather the query rows FIRST (bf16 one-hot MXU matmuls), then run the
    #      tiny heads on (B, .) only.  diseases index disease nodes (< nd) and
    #      mirnas index mirna nodes (>= nd), so the per-block heads apply. ----
    n_nodes = a_hat.shape[0]
    bsz = dis_ref.shape[0]
    node_id = lax.broadcasted_iota(jnp.int32, (bsz, n_nodes), 1)    # (B, N)
    onehot_d = (node_id == dis_ref[...]).astype(bf16)
    onehot_m = (node_id == mir_ref[...]).astype(bf16)
    logp_bf = logp.astype(bf16)
    feats_bf = feats.astype(bf16)

    logp_d = jnp.dot(onehot_d, logp_bf, preferred_element_type=f32)   # (B, nc)
    feat_d = jnp.dot(onehot_d, feats_bf, preferred_element_type=f32)  # (B, hid)
    logp_m = jnp.dot(onehot_m, logp_bf, preferred_element_type=f32)
    feat_m = jnp.dot(onehot_m, feats_bf, preferred_element_type=f32)

    def elu(y):
        return jnp.where(y > 0.0, y, jnp.exp(jnp.minimum(y, 0.0)) - 1.0)

    h_dis = elu(jnp.dot(logp_d, wd1_c_ref[...], preferred_element_type=f32)
                + jnp.dot(feat_d, wd1_f_ref[...], preferred_element_type=f32)
                + b_d1_ref[...])                                      # (B, out)
    h_mir = elu(jnp.dot(logp_m, wm1_c_ref[...], preferred_element_type=f32)
                + jnp.dot(feat_m, wm1_f_ref[...], preferred_element_type=f32)
                + b_m1_ref[...])                                      # (B, out)

    # ---- predict: contract the out dim, keep B on the lane axis -> (1, B) store ----
    dn = (((1,), (1,)), ((), ()))   # contract last dim of both operands
    logits = (lax.dot_general(w_p_top_ref[...], h_dis, dn, preferred_element_type=f32)
              + lax.dot_general(w_p_bot_ref[...], h_mir, dn, preferred_element_type=f32)
              + b_p_ref[...])                                         # (1, B)
    score_ref[...] = pl.reciprocal(1.0 + jnp.exp(-logits), approx=True)


# ----------------------------- forward (glue) -------------------------------


def _symmetric_normalize(adj):
    """D^{-1/2} A D^{-1/2} for a symmetric adjacency, normalized once (static graph).

    Only the row-sum is computed (symmetry), degrees clamped to 1 like the reference.
    """
    deg = jnp.maximum(jnp.sum(adj, axis=1, keepdims=True), 1.0)    # (N, 1)
    nrm = lax.rsqrt(deg)
    return (adj * nrm * nrm.T).astype(jnp.bfloat16)


def _derived_vmem_limit(args, n, hid, out_dim, n_class, bsz):
    """Scoped-VMEM limit derived from actual buffer bytes (not hard-coded)."""
    in_bytes = sum(int(a.size) * a.dtype.itemsize for a in args)
    scratch_bytes = 4 * n * hid                                    # feats scratch
    act_bytes = (4 * n * (4 * hid + 2 * out_dim + 2 * n_class)     # resident activations
                 + 4 * bsz * (2 * n + 4 * out_dim))
    total = in_bytes + scratch_bytes + act_bytes + 4 * bsz
    limit = 2 * total + (8 << 20)                                  # compiler headroom
    return int(max(16 << 20, min(limit, 64 << 20)))                # 64 MiB = v7x physical


def grand_forward(params, adj, d_sim, m_sim, diseases, mirnas,
                  *, num_diseases, order, node_dropout):
    f32 = jnp.float32
    N = adj.shape[0]
    nd = num_diseases
    hid = params["w_d"].shape[1]
    out_dim = params["w_g1"].shape[1]
    n_class = params["w_g2"].shape[1]

    # Static graph: normalize once (would be cached across calls in deployment).
    a_hat = _symmetric_normalize(adj)

    # Split the concat-layer weights once (tiny arrays, outside the kernel).
    wd1_c, wd1_f = params["w_d1"][:n_class, :], params["w_d1"][n_class:, :]
    wm1_c, wm1_f = params["w_m1"][:n_class, :], params["w_m1"][n_class:, :]
    w_p_top = params["w_p"][:out_dim, :].reshape(1, out_dim)
    w_p_bot = params["w_p"][out_dim:, :].reshape(1, out_dim)

    dis_idx = diseases.astype(jnp.int32).reshape(-1, 1)
    mir_idx = mirnas.astype(jnp.int32).reshape(-1, 1)
    B = dis_idx.shape[0]

    kernel = functools.partial(
        grand_fused_kernel,
        order=order,
        keep_scale=1.0 - node_dropout,
        num_diseases=nd,
    )

    args = (a_hat, d_sim, m_sim, params["w_d"], params["w_m"],
            params["w_g1"], params["b_g1"], params["w_g2"], params["b_g2"],
            wd1_c, wd1_f, params["b_d1"], wm1_c, wm1_f, params["b_m1"],
            w_p_top, w_p_bot, params["b_p"], dis_idx, mir_idx)

    score_row = pl.pallas_call(
        kernel,
        out_shape=jax.ShapeDtypeStruct((1, B), f32),   # lane-dense output
        in_specs=[_VMEM] * len(args),
        out_specs=_VMEM,
        scratch_shapes=[pltpu.VMEM((N, hid), f32)],
        compiler_params=pltpu.CompilerParams(
            vmem_limit_bytes=_derived_vmem_limit(args, N, hid, out_dim, n_class, B)),
    )(*args)
    return score_row.reshape(B, 1)


# ----------------------------- setup / main ----------------------------------


def init_params(key, *, d_sim_dim, m_sim_dim, hid_dim, out_dim, n_class):
    ks = jax.random.split(key, 12)

    def w(k, shape):
        fan_in = shape[0]
        return jax.random.normal(k, shape, jnp.float32) / jnp.sqrt(float(fan_in))

    return {
        "w_d": w(ks[0], (d_sim_dim, hid_dim)),
        "w_m": w(ks[1], (m_sim_dim, hid_dim)),
        "w_g1": w(ks[2], (hid_dim, out_dim)),
        "b_g1": 0.01 * jax.random.normal(ks[3], (1, out_dim), jnp.float32),
        "w_g2": w(ks[4], (out_dim, n_class)),
        "b_g2": 0.01 * jax.random.normal(ks[5], (1, n_class), jnp.float32),
        "w_d1": w(ks[6], (n_class + hid_dim, out_dim)),
        "b_d1": 0.01 * jax.random.normal(ks[7], (1, out_dim), jnp.float32),
        "w_m1": w(ks[8], (n_class + hid_dim, out_dim)),
        "b_m1": 0.01 * jax.random.normal(ks[9], (1, out_dim), jnp.float32),
        "w_p": w(ks[10], (2 * out_dim, 1)),
        "b_p": 0.01 * jax.random.normal(ks[11], (1, 1), jnp.float32),
    }


if __name__ == "__main__":
    num_diseases, num_mirnas = 6, 10
    N = num_diseases + num_mirnas
    d_sim_dim, m_sim_dim = 8, 12
    hid_dim = out_dim = 32          # hid_dim must equal out_dim (concat into *_fc1)
    n_class = 4
    K = 3                           # GRANDConv order
    node_dropout = 0.5
    B = 8                           # number of (disease, mirna) query pairs

    key = jax.random.PRNGKey(0)
    k_par, k_adj, k_d, k_m, k_di, k_mi = jax.random.split(key, 6)

    params = init_params(k_par, d_sim_dim=d_sim_dim, m_sim_dim=m_sim_dim,
                         hid_dim=hid_dim, out_dim=out_dim, n_class=n_class)

    # Symmetric 0/1 adjacency (undirected graph), no self-loops.
    a = (jax.random.uniform(k_adj, (N, N)) < 0.3).astype(jnp.float32)
    adj = jnp.maximum(a, a.T) * (1.0 - jnp.eye(N, dtype=jnp.float32))

    d_sim = jax.random.normal(k_d, (num_diseases, d_sim_dim), jnp.float32)
    m_sim = jax.random.normal(k_m, (num_mirnas, m_sim_dim), jnp.float32)

    diseases = jax.random.randint(k_di, (B,), 0, num_diseases)
    mirnas = jax.random.randint(k_mi, (B,), num_diseases, N)

    out = grand_forward(params, adj, d_sim, m_sim, diseases, mirnas,
                        num_diseases=num_diseases, order=K,
                        node_dropout=node_dropout)
    out = jax.block_until_ready(out)

    assert out.shape == (B, 1)
    assert bool(jnp.all(jnp.isfinite(out)))
    assert bool(jnp.all((out >= 0.0) & (out <= 1.0)))
    print("KERNEL_OK")
</pallas_src>

<mosaic_0001>
module attributes {stable_mosaic.version = 11 : i64} {
  func.func @grand_fused_kernel(%arg0: memref<16x16xbf16, #tpu.memory_space<vmem>>, %arg1: memref<6x8xf32, #tpu.memory_space<vmem>>, %arg2: memref<10x12xf32, #tpu.memory_space<vmem>>, %arg3: memref<8x32xf32, #tpu.memory_space<vmem>>, %arg4: memref<12x32xf32, #tpu.memory_space<vmem>>, %arg5: memref<32x32xf32, #tpu.memory_space<vmem>>, %arg6: memref<1x32xf32, #tpu.memory_space<vmem>>, %arg7: memref<32x4xf32, #tpu.memory_space<vmem>>, %arg8: memref<1x4xf32, #tpu.memory_space<vmem>>, %arg9: memref<4x32xf32, #tpu.memory_space<vmem>>, %arg10: memref<32x32xf32, #tpu.memory_space<vmem>>, %arg11: memref<1x32xf32, #tpu.memory_space<vmem>>, %arg12: memref<4x32xf32, #tpu.memory_space<vmem>>, %arg13: memref<32x32xf32, #tpu.memory_space<vmem>>, %arg14: memref<1x32xf32, #tpu.memory_space<vmem>>, %arg15: memref<1x32xf32, #tpu.memory_space<vmem>>, %arg16: memref<1x32xf32, #tpu.memory_space<vmem>>, %arg17: memref<1x1xf32, #tpu.memory_space<vmem>>, %arg18: memref<8x1xi32, #tpu.memory_space<vmem>>, %arg19: memref<8x1xi32, #tpu.memory_space<vmem>>, %arg20: memref<1x8xf32, #tpu.memory_space<vmem>>, %arg21: memref<16x32xf32, #tpu.memory_space<vmem>>) attributes {dimension_semantics = [], scalar_prefetch = 0 : i64, scratch_operands = 1 : i64, tpu.core_type = #tpu.core_type<tc>} {
    %c0 = arith.constant 0 : index
    %c0_0 = arith.constant 0 : index
    %0 = vector.load %arg0[%c0, %c0_0] : memref<16x16xbf16, #tpu.memory_space<vmem>>, vector<16x16xbf16>
    %c0_1 = arith.constant 0 : index
    %c0_2 = arith.constant 0 : index
    %1 = vector.load %arg1[%c0_1, %c0_2] : memref<6x8xf32, #tpu.memory_space<vmem>>, vector<6x8xf32>
    %c0_3 = arith.constant 0 : index
    %c0_4 = arith.constant 0 : index
    %2 = vector.load %arg3[%c0_3, %c0_4] : memref<8x32xf32, #tpu.memory_space<vmem>>, vector<8x32xf32>
    %cst = arith.constant dense<0.000000e+00> : vector<6x32xf32>
    %3 = tpu.matmul %1, %2, %cst {dimension_numbers = #tpu.dot_dimension_numbers<[1], [0], [0], [1], [0, 0, 1, 1], [], []>} : vector<6x8xf32>, vector<8x32xf32>, vector<6x32xf32> -> vector<6x32xf32>
    %c0_5 = arith.constant 0 : index
    %c0_6 = arith.constant 0 : index
    %4 = vector.load %arg21[%c0_5, %c0_6] : memref<16x32xf32, #tpu.memory_space<vmem>>, vector<6x32xf32>
    tpu.vector_store %arg21[%c0_5, %c0_6], %3 {strides = array<i32>} : memref<16x32xf32, #tpu.memory_space<vmem>>, vector<6x32xf32>,
    %c0_7 = arith.constant 0 : index
    %c0_8 = arith.constant 0 : index
    %5 = vector.load %arg2[%c0_7, %c0_8] : memref<10x12xf32, #tpu.memory_space<vmem>>, vector<10x12xf32>
    %c0_9 = arith.constant 0 : index
    %c0_10 = arith.constant 0 : index
    %6 = vector.load %arg4[%c0_9, %c0_10] : memref<12x32xf32, #tpu.memory_space<vmem>>, vector<12x32xf32>
    %cst_11 = arith.constant dense<0.000000e+00> : vector<10x32xf32>
    %7 = tpu.matmul %5, %6, %cst_11 {dimension_numbers = #tpu.dot_dimension_numbers<[1], [0], [0], [1], [0, 0, 1, 1], [], []>} : vector<10x12xf32>, vector<12x32xf32>, vector<10x32xf32> -> vector<10x32xf32>
    %c6 = arith.constant 6 : index
    %c0_12 = arith.constant 0 : index
    %8 = vector.load %arg21[%c6, %c0_12] : memref<16x32xf32, #tpu.memory_space<vmem>>, vector<10x32xf32>
    tpu.vector_store %arg21[%c6, %c0_12], %7 {strides = array<i32>} : memref<16x32xf32, #tpu.memory_space<vmem>>, vector<10x32xf32>,
    %c0_13 = arith.constant 0 : index
    %c0_14 = arith.constant 0 : index
    %9 = vector.load %arg21[%c0_13, %c0_14] : memref<16x32xf32, #tpu.memory_space<vmem>>, vector<16x32xf32>
    %10 = arith.truncf %9 : vector<16x32xf32> to vector<16x32xbf16>
    %cst_15 = arith.constant dense<0.000000e+00> : vector<16x32xf32>
    %11 = tpu.matmul %0, %10, %cst_15 {dimension_numbers = #tpu.dot_dimension_numbers<[1], [0], [0], [1], [0, 0, 1, 1], [], []>} : vector<16x16xbf16>, vector<16x32xbf16>, vector<16x32xf32> -> vector<16x32xf32>
    %12 = arith.addf %9, %11 : vector<16x32xf32>
    %13 = arith.truncf %11 : vector<16x32xf32> to vector<16x32xbf16>
    %cst_16 = arith.constant dense<0.000000e+00> : vector<16x32xf32>
    %14 = tpu.matmul %0, %13, %cst_16 {dimension_numbers = #tpu.dot_dimension_numbers<[1], [0], [0], [1], [0, 0, 1, 1], [], []>} : vector<16x16xbf16>, vector<16x32xbf16>, vector<16x32xf32> -> vector<16x32xf32>
    %15 = arith.addf %12, %14 : vector<16x32xf32>
    %16 = arith.truncf %14 : vector<16x32xf32> to vector<16x32xbf16>
    %cst_17 = arith.constant dense<0.000000e+00> : vector<16x32xf32>
    %17 = tpu.matmul %0, %16, %cst_17 {dimension_numbers = #tpu.dot_dimension_numbers<[1], [0], [0], [1], [0, 0, 1, 1], [], []>} : vector<16x16xbf16>, vector<16x32xbf16>, vector<16x32xf32> -> vector<16x32xf32>
    %18 = arith.addf %15, %17 : vector<16x32xf32>
    %cst_18 = arith.constant 1.250000e-01 : f32
    %19 = vector.broadcast %cst_18 : f32 to vector<16x32xf32>
    %20 = arith.mulf %18, %19 : vector<16x32xf32>
    %c0_19 = arith.constant 0 : index
    %c0_20 = arith.constant 0 : index
    %21 = vector.load %arg5[%c0_19, %c0_20] : memref<32x32xf32, #tpu.memory_space<vmem>>, vector<32x32xf32>
    %cst_21 = arith.constant dense<0.000000e+00> : vector<16x32xf32>
    %22 = tpu.matmul %20, %21, %cst_21 {dimension_numbers = #tpu.dot_dimension_numbers<[1], [0], [0], [1], [0, 0, 1, 1], [], []>} : vector<16x32xf32>, vector<32x32xf32>, vector<16x32xf32> -> vector<16x32xf32>
    %23 = arith.truncf %22 : vector<16x32xf32> to vector<16x32xbf16>
    %cst_22 = arith.constant dense<0.000000e+00> : vector<16x32xf32>
    %24 = tpu.matmul %0, %23, %cst_22 {dimension_numbers = #tpu.dot_dimension_numbers<[1], [0], [0], [1], [0, 0, 1, 1], [], []>} : vector<16x16xbf16>, vector<16x32xbf16>, vector<16x32xf32> -> vector<16x32xf32>
    %c0_23 = arith.constant 0 : index
    %c0_24 = arith.constant 0 : index
    %25 = vector.load %arg6[%c0_23, %c0_24] : memref<1x32xf32, #tpu.memory_space<vmem>>, vector<1x32xf32>
    %26 = vector.broadcast %25 : vector<1x32xf32> to vector<16x32xf32>
    %27 = arith.addf %24, %26 : vector<16x32xf32>
    %c0_25 = arith.constant 0 : index
    %c0_26 = arith.constant 0 : index
    %28 = vector.load %arg7[%c0_25, %c0_26] : memref<32x4xf32, #tpu.memory_space<vmem>>, vector<32x4xf32>
    %cst_27 = arith.constant dense<0.000000e+00> : vector<16x4xf32>
    %29 = tpu.matmul %27, %28, %cst_27 {dimension_numbers = #tpu.dot_dimension_numbers<[1], [0], [0], [1], [0, 0, 1, 1], [], []>} : vector<16x32xf32>, vector<32x4xf32>, vector<16x4xf32> -> vector<16x4xf32>
    %30 = arith.truncf %29 : vector<16x4xf32> to vector<16x4xbf16>
    %cst_28 = arith.constant dense<0.000000e+00> : vector<16x4xf32>
    %31 = tpu.matmul %0, %30, %cst_28 {dimension_numbers = #tpu.dot_dimension_numbers<[1], [0], [0], [1], [0, 0, 1, 1], [], []>} : vector<16x16xbf16>, vector<16x4xbf16>, vector<16x4xf32> -> vector<16x4xf32>
    %c0_29 = arith.constant 0 : index
    %c0_30 = arith.constant 0 : index
    %32 = vector.load %arg8[%c0_29, %c0_30] : memref<1x4xf32, #tpu.memory_space<vmem>>, vector<1x4xf32>
    %33 = vector.broadcast %32 : vector<1x4xf32> to vector<16x4xf32>
    %34 = arith.addf %31, %33 : vector<16x4xf32>
    %cst_31 = arith.constant dense<0xFF800000> : vector<16xf32>
    %35 = vector.multi_reduction <maximumf>, %34, %cst_31 [1] : vector<16x4xf32> to vector<16xf32>
    %36 = vector.shape_cast %35 : vector<16xf32> to vector<16x1xf32>
    %37 = vector.broadcast %36 : vector<16x1xf32> to vector<16x4xf32>
    %38 = arith.subf %34, %37 : vector<16x4xf32>
    %39 = math.exp %38 : vector<16x4xf32>
    %cst_32 = arith.constant dense<0.000000e+00> : vector<16xf32>
    %40 = vector.multi_reduction <add>, %39, %cst_32 [1] : vector<16x4xf32> to vector<16xf32>
    %41 = vector.shape_cast %40 : vector<16xf32> to vector<16x1xf32>
    %42 = math.log %41 : vector<16x1xf32>
    %43 = vector.broadcast %42 : vector<16x1xf32> to vector<16x4xf32>
    %44 = arith.subf %38, %43 : vector<16x4xf32>
    %45 = tpu.iota {dimensions = array<i32: 1>} : vector<8x16xi32>
    %c0_33 = arith.constant 0 : index
    %c0_34 = arith.constant 0 : index
    %46 = vector.load %arg18[%c0_33, %c0_34] : memref<8x1xi32, #tpu.memory_space<vmem>>, vector<8x1xi32>
    %47 = vector.broadcast %46 : vector<8x1xi32> to vector<8x16xi32>
    %48 = arith.cmpi eq, %45, %47 : vector<8x16xi32>
    %49 = arith.extui %48 : vector<8x16xi1> to vector<8x16xi32>
    %50 = arith.sitofp %49 : vector<8x16xi32> to vector<8x16xf32>
    %51 = arith.truncf %50 : vector<8x16xf32> to vector<8x16xbf16>
    %c0_35 = arith.constant 0 : index
    %c0_36 = arith.constant 0 : index
    %52 = vector.load %arg19[%c0_35, %c0_36] : memref<8x1xi32, #tpu.memory_space<vmem>>, vector<8x1xi32>
    %53 = vector.broadcast %52 : vector<8x1xi32> to vector<8x16xi32>
    %54 = arith.cmpi eq, %45, %53 : vector<8x16xi32>
    %55 = arith.extui %54 : vector<8x16xi1> to vector<8x16xi32>
    %56 = arith.sitofp %55 : vector<8x16xi32> to vector<8x16xf32>
    %57 = arith.truncf %56 : vector<8x16xf32> to vector<8x16xbf16>
    %58 = arith.truncf %44 : vector<16x4xf32> to vector<16x4xbf16>
    %59 = arith.truncf %9 : vector<16x32xf32> to vector<16x32xbf16>
    %cst_37 = arith.constant dense<0.000000e+00> : vector<8x4xf32>
    %60 = tpu.matmul %51, %58, %cst_37 {dimension_numbers = #tpu.dot_dimension_numbers<[1], [0], [0], [1], [0, 0, 1, 1], [], []>} : vector<8x16xbf16>, vector<16x4xbf16>, vector<8x4xf32> -> vector<8x4xf32>
    %cst_38 = arith.constant dense<0.000000e+00> : vector<8x32xf32>
    %61 = tpu.matmul %51, %59, %cst_38 {dimension_numbers = #tpu.dot_dimension_numbers<[1], [0], [0], [1], [0, 0, 1, 1], [], []>} : vector<8x16xbf16>, vector<16x32xbf16>, vector<8x32xf32> -> vector<8x32xf32>
    %cst_39 = arith.constant dense<0.000000e+00> : vector<8x4xf32>
    %62 = tpu.matmul %57, %58, %cst_39 {dimension_numbers = #tpu.dot_dimension_numbers<[1], [0], [0], [1], [0, 0, 1, 1], [], []>} : vector<8x16xbf16>, vector<16x4xbf16>, vector<8x4xf32> -> vector<8x4xf32>
    %cst_40 = arith.constant dense<0.000000e+00> : vector<8x32xf32>
    %63 = tpu.matmul %57, %59, %cst_40 {dimension_numbers = #tpu.dot_dimension_numbers<[1], [0], [0], [1], [0, 0, 1, 1], [], []>} : vector<8x16xbf16>, vector<16x32xbf16>, vector<8x32xf32> -> vector<8x32xf32>
    %c0_41 = arith.constant 0 : index
    %c0_42 = arith.constant 0 : index
    %64 = vector.load %arg9[%c0_41, %c0_42] : memref<4x32xf32, #tpu.memory_space<vmem>>, vector<4x32xf32>
    %cst_43 = arith.constant dense<0.000000e+00> : vector<8x32xf32>
    %65 = tpu.matmul %60, %64, %cst_43 {dimension_numbers = #tpu.dot_dimension_numbers<[1], [0], [0], [1], [0, 0, 1, 1], [], []>} : vector<8x4xf32>, vector<4x32xf32>, vector<8x32xf32> -> vector<8x32xf32>
    %c0_44 = arith.constant 0 : index
    %c0_45 = arith.constant 0 : index
    %66 = vector.load %arg10[%c0_44, %c0_45] : memref<32x32xf32, #tpu.memory_space<vmem>>, vector<32x32xf32>
    %cst_46 = arith.constant dense<0.000000e+00> : vector<8x32xf32>
    %67 = tpu.matmul %61, %66, %cst_46 {dimension_numbers = #tpu.dot_dimension_numbers<[1], [0], [0], [1], [0, 0, 1, 1], [], []>} : vector<8x32xf32>, vector<32x32xf32>, vector<8x32xf32> -> vector<8x32xf32>
    %68 = arith.addf %65, %67 : vector<8x32xf32>
    %c0_47 = arith.constant 0 : index
    %c0_48 = arith.constant 0 : index
    %69 = vector.load %arg11[%c0_47, %c0_48] : memref<1x32xf32, #tpu.memory_space<vmem>>, vector<1x32xf32>
    %70 = vector.broadcast %69 : vector<1x32xf32> to vector<8x32xf32>
    %71 = arith.addf %68, %70 : vector<8x32xf32>
    %cst_49 = arith.constant 0.000000e+00 : f32
    %72 = vector.broadcast %cst_49 : f32 to vector<8x32xf32>
    %73 = arith.cmpf ogt, %71, %72 : vector<8x32xf32>
    %cst_50 = arith.constant 0.000000e+00 : f32
    %74 = vector.broadcast %cst_50 : f32 to vector<8x32xf32>
    %75 = arith.minimumf %71, %74 : vector<8x32xf32>
    %76 = math.exp %75 : vector<8x32xf32>
    %cst_51 = arith.constant 1.000000e+00 : f32
    %77 = vector.broadcast %cst_51 : f32 to vector<8x32xf32>
    %78 = arith.subf %76, %77 : vector<8x32xf32>
    %79 = arith.select %73, %71, %78 : vector<8x32xi1>, vector<8x32xf32>
    %c0_52 = arith.constant 0 : index
    %c0_53 = arith.constant 0 : index
    %80 = vector.load %arg12[%c0_52, %c0_53] : memref<4x32xf32, #tpu.memory_space<vmem>>, vector<4x32xf32>
    %cst_54 = arith.constant dense<0.000000e+00> : vector<8x32xf32>
    %81 = tpu.matmul %62, %80, %cst_54 {dimension_numbers = #tpu.dot_dimension_numbers<[1], [0], [0], [1], [0, 0, 1, 1], [], []>} : vector<8x4xf32>, vector<4x32xf32>, vector<8x32xf32> -> vector<8x32xf32>
    %c0_55 = arith.constant 0 : index
    %c0_56 = arith.constant 0 : index
    %82 = vector.load %arg13[%c0_55, %c0_56] : memref<32x32xf32, #tpu.memory_space<vmem>>, vector<32x32xf32>
    %cst_57 = arith.constant dense<0.000000e+00> : vector<8x32xf32>
    %83 = tpu.matmul %63, %82, %cst_57 {dimension_numbers = #tpu.dot_dimension_numbers<[1], [0], [0], [1], [0, 0, 1, 1], [], []>} : vector<8x32xf32>, vector<32x32xf32>, vector<8x32xf32> -> vector<8x32xf32>
    %84 = arith.addf %81, %83 : vector<8x32xf32>
    %c0_58 = arith.constant 0 : index
    %c0_59 = arith.constant 0 : index
    %85 = vector.load %arg14[%c0_58, %c0_59] : memref<1x32xf32, #tpu.memory_space<vmem>>, vector<1x32xf32>
    %86 = vector.broadcast %85 : vector<1x32xf32> to vector<8x32xf32>
    %87 = arith.addf %84, %86 : vector<8x32xf32>
    %cst_60 = arith.constant 0.000000e+00 : f32
    %88 = vector.broadcast %cst_60 : f32 to vector<8x32xf32>
    %89 = arith.cmpf ogt, %87, %88 : vector<8x32xf32>
    %cst_61 = arith.constant 0.000000e+00 : f32
    %90 = vector.broadcast %cst_61 : f32 to vector<8x32xf32>
    %91 = arith.minimumf %87, %90 : vector<8x32xf32>
    %92 = math.exp %91 : vector<8x32xf32>
    %cst_62 = arith.constant 1.000000e+00 : f32
    %93 = vector.broadcast %cst_62 : f32 to vector<8x32xf32>
    %94 = arith.subf %92, %93 : vector<8x32xf32>
    %95 = arith.select %89, %87, %94 : vector<8x32xi1>, vector<8x32xf32>
    %c0_63 = arith.constant 0 : index
    %c0_64 = arith.constant 0 : index
    %96 = vector.load %arg15[%c0_63, %c0_64] : memref<1x32xf32, #tpu.memory_space<vmem>>, vector<1x32xf32>
    %cst_65 = arith.constant dense<0.000000e+00> : vector<1x8xf32>
    %97 = tpu.matmul %96, %79, %cst_65 {dimension_numbers = #tpu.dot_dimension_numbers<[1], [1], [0], [0], [0, 0, 1, 0], [], []>} : vector<1x32xf32>, vector<8x32xf32>, vector<1x8xf32> -> vector<1x8xf32>
    %c0_66 = arith.constant 0 : index
    %c0_67 = arith.constant 0 : index
    %98 = vector.load %arg16[%c0_66, %c0_67] : memref<1x32xf32, #tpu.memory_space<vmem>>, vector<1x32xf32>
    %cst_68 = arith.constant dense<0.000000e+00> : vector<1x8xf32>
    %99 = tpu.matmul %98, %95, %cst_68 {dimension_numbers = #tpu.dot_dimension_numbers<[1], [1], [0], [0], [0, 0, 1, 0], [], []>} : vector<1x32xf32>, vector<8x32xf32>, vector<1x8xf32> -> vector<1x8xf32>
    %100 = arith.addf %97, %99 : vector<1x8xf32>
    %c0_69 = arith.constant 0 : index
    %c0_70 = arith.constant 0 : index
    %101 = vector.load %arg17[%c0_69, %c0_70] : memref<1x1xf32, #tpu.memory_space<vmem>>, vector<1x1xf32>
    %102 = vector.broadcast %101 : vector<1x1xf32> to vector<1x8xf32>
    %103 = arith.addf %100, %102 : vector<1x8xf32>
    %cst_71 = arith.constant 0.000000e+00 : f32
    %104 = vector.broadcast %cst_71 : f32 to vector<1x8xf32>
    %105 = arith.subf %104, %103 : vector<1x8xf32>
    %106 = math.exp %105 : vector<1x8xf32>
    %cst_72 = arith.constant 1.000000e+00 : f32
    %107 = vector.broadcast %cst_72 : f32 to vector<1x8xf32>
    %108 = arith.addf %107, %106 : vector<1x8xf32>
    %109 = tpu.reciprocal %108 {approx = true} : vector<1x8xf32> -> vector<1x8xf32>
    %c0_73 = arith.constant 0 : index
    %c0_74 = arith.constant 0 : index
    %110 = vector.load %arg20[%c0_73, %c0_74] : memref<1x8xf32, #tpu.memory_space<vmem>>, vector<1x8xf32>
    tpu.vector_store %arg20[%c0_73, %c0_74], %109 {strides = array<i32>} : memref<1x8xf32, #tpu.memory_space<vmem>>, vector<1x8xf32>,
    return
  }
}

</mosaic_0001>

<llo_original>
// kernel: tpu_custom_call.1
$region0: #{tpu_custom_call.1}
  #allocation0 [shape = 'u32[]', space=smem, size = 0x4, offset = 0x4, fixed_abs, tag = 'smem constant byte address 0x4 - core index']
  #allocation1 [shape = 'u32[72,128]{1,0:T(1,128)}', space=vmem, size = 0x9000, scoped, tag = 'internal scratch']
  #allocation2 [shape = 'f32[16,32]{1,0:T(8,128)}', space=vmem, size = 0x2000, scoped, tag = 'scratch operand']
  #allocation3 [shape = 'f32[1,1]{1,0:T(1,128)S(1)}', space=vmem, size = 0x200, scoped, tag = 'scoped memory for tpu_custom_call.1']
  %s0 = inlined_call_operand.vmem [shape: bf16[16,16], index: 0, kind: input, shape index: {}]
  %s1 = inlined_call_operand.vmem [shape: f32[6,8], index: 1, kind: input, shape index: {}]
  %s2 = inlined_call_operand.hbm [shape: f32[10,12], index: 2, kind: input, shape index: {}]
  %s3 = inlined_call_operand.hbm [shape: f32[8,32], index: 3, kind: input, shape index: {}]
  %s4 = inlined_call_operand.hbm [shape: f32[12,32], index: 4, kind: input, shape index: {}]
  %s5 = inlined_call_operand.vmem [shape: f32[32,32], index: 5, kind: input, shape index: {}]
  %s6 = inlined_call_operand.vmem [shape: f32[1,32], index: 6, kind: input, shape index: {}]
  %s7 = inlined_call_operand.vmem [shape: f32[32,4], index: 7, kind: input, shape index: {}]
  %s8 = inlined_call_operand.hbm [shape: f32[1,4], index: 8, kind: input, shape index: {}]
  %s9 = inlined_call_operand.vmem [shape: f32[4,32], index: 9, kind: input, shape index: {}]
  %s10 = inlined_call_operand.hbm [shape: f32[32,32], index: 10, kind: input, shape index: {}]
  %s11 = inlined_call_operand.vmem [shape: f32[1,32], index: 11, kind: input, shape index: {}]
  %s12 = inlined_call_operand.vmem [shape: f32[4,32], index: 12, kind: input, shape index: {}]
  %s13 = inlined_call_operand.hbm [shape: f32[32,32], index: 13, kind: input, shape index: {}]
  %s14 = inlined_call_operand.vmem [shape: f32[1,32], index: 14, kind: input, shape index: {}]
  %s15 = inlined_call_operand.vmem [shape: f32[1,32], index: 15, kind: input, shape index: {}]
  %s16 = inlined_call_operand.vmem [shape: f32[1,32], index: 16, kind: input, shape index: {}]
  %s17 = inlined_call_operand.<no memory space> [shape: f32[1,1], index: 17, kind: input, shape index: {}]
  %s18 = inlined_call_operand.vmem [shape: s32[8,1], index: 18, kind: input, shape index: {}]
  %s19 = inlined_call_operand.vmem [shape: s32[8,1], index: 19, kind: input, shape index: {}]
  %s20 = inlined_call_operand.hbm [shape: f32[1,8], index: 20, kind: output, shape index: {}]
  %s21 = sld [smem:[#allocation0]]
  $region114: #{tpu_custom_call.1} parent=0
    _
  %s23 = ssub.s32 1, %s21
  %s24 = scalar_select 0, %s23, %s21
  %v25 = vstv %s17
  %26 = vst [vmem:[#allocation3] sm:$0x1] %v25
  $region1: #{tpu_custom_call.1} parent=0
    #allocation4 [shape = 'u8[8192]{0}', space=vmem, size = 0x2000, scoped, tag = 'input window, operand 2, single buffered']
    #allocation5 [shape = 's32[1]{0}', space=sflag, size = 0x4, scoped, tag = 'scoped memory for tpu_custom_call.1']
    #allocation6 [shape = 's32[1]{0}', space=sflag, size = 0x4, scoped, tag = 'scoped memory for tpu_custom_call.1']
    #allocation7 [shape = 'u8[4096]{0}', space=vmem, size = 0x1000, scoped, tag = 'input window, operand 3, single buffered']
    #allocation8 [shape = 's32[1]{0}', space=sflag, size = 0x4, scoped, tag = 'scoped memory for tpu_custom_call.1']
    #allocation9 [shape = 'u8[8192]{0}', space=vmem, size = 0x2000, scoped, tag = 'input window, operand 4, single buffered']
    #allocation10 [shape = 'u8[512]{0}', space=vmem, size = 0x400, scoped, tag = 'input window, operand 8, single buffered']
    #allocation11 [shape = 's32[1]{0}', space=sflag, size = 0x4, scoped, tag = 'scoped memory for tpu_custom_call.1']
    #allocation12 [shape = 'u8[16384]{0}', space=vmem, size = 0x4000, scoped, tag = 'input window, operand 10, single buffered']
    #allocation13 [shape = 'u8[16384]{0}', space=vmem, size = 0x4000, scoped, tag = 'input window, operand 13, single buffered']
    #allocation14 [shape = 's32[1]{0}', space=sflag, size = 0x4, scoped, tag = 'scoped memory for tpu_custom_call.1']
    #allocation15 [shape = 'u8[512]{0}', space=vmem, size = 0x400, scoped, tag = 'output window, operand 0, single buffered']
    %27 = vsyncpa [#allocation5], 0
    %28 = vsyncpa [#allocation8], 0
    %29 = vsyncpa [#allocation11], 0
    %30 = vsyncpa [#allocation14], 0
    %31 = vsyncpa [#allocation6], 0
    // Predicated region
    $region2: #{tpu_custom_call.1} parent=1 // pred_check
      _
    $region3: #{tpu_custom_call.1} parent=1 // pred_check_branch
      %33 = sbr.rel (0) target = $region5
    $region4: #{tpu_custom_call.1} parent=1 // pred_region
      _
    $region5: #{tpu_custom_call.1} parent=1 // pred_fallthru
      _
    // Predicated region
    $region6: #{tpu_custom_call.1} parent=1 // pred_check
      _
    $region7: #{tpu_custom_call.1} parent=1 // pred_check_branch
      %35 = sbr.rel (0) target = $region9
    $region8: #{tpu_custom_call.1} parent=1 // pred_region
      _
    $region9: #{tpu_custom_call.1} parent=1 // pred_fallthru
      _
    // Predicated region
    $region10: #{tpu_custom_call.1} parent=1 // pred_check
      _
    $region11: #{tpu_custom_call.1} parent=1 // pred_check_branch
      %37 = sbr.rel (0) target = $region13
    $region12: #{tpu_custom_call.1} parent=1 // pred_region
      %39 = vsyncadd [#allocation5], 0
      %s40 = sshll.u32 %s2, 4
      %s41 = int_to_ptr.hbm [resolvable:$true] %s40
      %s42 = sshll.u32 [#allocation4], 4
      %s43 = int_to_ptr.vmem [resolvable:$true] %s42
      %48 = dma.hbm_to_vmem [thread:$0]  %s41, 256, %s43, [#allocation5], 128, 128, 8
    $region13: #{tpu_custom_call.1} parent=1 // pred_fallthru
      _
    // Predicated region
    $region14: #{tpu_custom_call.1} parent=1 // pred_check
      _
    $region15: #{tpu_custom_call.1} parent=1 // pred_check_branch
      %50 = sbr.rel (0) target = $region17
    $region16: #{tpu_custom_call.1} parent=1 // pred_region
      %52 = vsyncadd [#allocation8], 0
      %s54 = sshll.u32 %s3, 4
      %s55 = int_to_ptr.hbm [resolvable:$true] %s54
      %s56 = sshll.u32 [#allocation7], 4
      %s57 = int_to_ptr.vmem [resolvable:$true] %s56
      %59 = dma.hbm_to_vmem [thread:$0]  %s55, 128, %s57, [#allocation8]
    $region17: #{tpu_custom_call.1} parent=1 // pred_fallthru
      _
    // Predicated region
    $region18: #{tpu_custom_call.1} parent=1 // pred_check
      _
    $region19: #{tpu_custom_call.1} parent=1 // pred_check_branch
      %61 = sbr.rel (0) target = $region21
    $region20: #{tpu_custom_call.1} parent=1 // pred_region
      %63 = vsyncadd [#allocation8], 0
      %s64 = sshll.u32 %s4, 4
      %s65 = int_to_ptr.hbm [resolvable:$true] %s64
      %s66 = sshll.u32 [#allocation9], 4
      %s67 = int_to_ptr.vmem [resolvable:$true] %s66
      %72 = dma.hbm_to_vmem [thread:$0]  %s65, 256, %s67, [#allocation8], 128, 128, 8
    $region21: #{tpu_custom_call.1} parent=1 // pred_fallthru
      _
    // Predicated region
    $region22: #{tpu_custom_call.1} parent=1 // pred_check
      _
    $region23: #{tpu_custom_call.1} parent=1 // pred_check_branch
      %74 = sbr.rel (0) target = $region25
    $region24: #{tpu_custom_call.1} parent=1 // pred_region
      _
    $region25: #{tpu_custom_call.1} parent=1 // pred_fallthru
      _
    // Predicated region
    $region26: #{tpu_custom_call.1} parent=1 // pred_check
      _
    $region27: #{tpu_custom_call.1} parent=1 // pred_check_branch
      %76 = sbr.rel (0) target = $region29
    $region28: #{tpu_custom_call.1} parent=1 // pred_region
      _
    $region29: #{tpu_custom_call.1} parent=1 // pred_fallthru
      _
    // Predicated region
    $region30: #{tpu_custom_call.1} parent=1 // pred_check
      _
    $region31: #{tpu_custom_call.1} parent=1 // pred_check_branch
      %78 = sbr.rel (0) target = $region33
    $region32: #{tpu_custom_call.1} parent=1 // pred_region
      _
    $region33: #{tpu_custom_call.1} parent=1 // pred_fallthru
      _
    // Predicated region
    $region34: #{tpu_custom_call.1} parent=1 // pred_check
      _
    $region35: #{tpu_custom_call.1} parent=1 // pred_check_branch
      %80 = sbr.rel (0) target = $region37
    $region36: #{tpu_custom_call.1} parent=1 // pred_region
      %82 = vsyncadd [#allocation11], 0
      %s84 = sshll.u32 %s8, 4
      %s85 = int_to_ptr.hbm [resolvable:$true] %s84
      %s86 = sshll.u32 [#allocation10], 4
      %s87 = int_to_ptr.vmem [resolvable:$true] %s86
      %89 = dma.hbm_to_vmem [thread:$0]  %s85, 16, %s87, [#allocation11]
    $region37: #{tpu_custom_call.1} parent=1 // pred_fallthru
      _
    // Predicated region
    $region38: #{tpu_custom_call.1} parent=1 // pred_check
      _
    $region39: #{tpu_custom_call.1} parent=1 // pred_check_branch
      %91 = sbr.rel (0) target = $region41
    $region40: #{tpu_custom_call.1} parent=1 // pred_region
      _
    $region41: #{tpu_custom_call.1} parent=1 // pred_fallthru
      _
    // Predicated region
    $region42: #{tpu_custom_call.1} parent=1 // pred_check
      _
    $region43: #{tpu_custom_call.1} parent=1 // pred_check_branch
      %93 = sbr.rel (0) target = $region45
    $region44: #{tpu_custom_call.1} parent=1 // pred_region
      %95 = vsyncadd [#allocation11], 0
      %s96 = sshll.u32 %s10, 4
      %s97 = int_to_ptr.hbm [resolvable:$true] %s96
      %s98 = sshll.u32 [#allocation12], 4
      %s99 = int_to_ptr.vmem [resolvable:$true] %s98
      %104 = dma.hbm_to_vmem [thread:$0]  %s97, 512, %s99, [#allocation11], 128, 128, 8
    $region45: #{tpu_custom_call.1} parent=1 // pred_fallthru
      _
    // Predicated region
    $region46: #{tpu_custom_call.1} parent=1 // pred_check
      _
    $region47: #{tpu_custom_call.1} parent=1 // pred_check_branch
      %106 = sbr.rel (0) target = $region49
    $region48: #{tpu_custom_call.1} parent=1 // pred_region
      _
    $region49: #{tpu_custom_call.1} parent=1 // pred_fallthru
      _
    // Predicated region
    $region50: #{tpu_custom_call.1} parent=1 // pred_check
      _
    $region51: #{tpu_custom_call.1} parent=1 // pred_check_branch
      %108 = sbr.rel (0) target = $region53
    $region52: #{tpu_custom_call.1} parent=1 // pred_region
      _
    $region53: #{tpu_custom_call.1} parent=1 // pred_fallthru
      _
    // Predicated region
    $region54: #{tpu_custom_call.1} parent=1 // pred_check
      _
    $region55: #{tpu_custom_call.1} parent=1 // pred_check_branch
      %110 = sbr.rel (0) target = $region57
    $region56: #{tpu_custom_call.1} parent=1 // pred_region
      %112 = vsyncadd [#allocation14], 0
      %s113 = sshll.u32 %s13, 4
      %s114 = int_to_ptr.hbm [resolvable:$true] %s113
      %s115 = sshll.u32 [#allocation13], 4
      %s116 = int_to_ptr.vmem [resolvable:$true] %s115
      %121 = dma.hbm_to_vmem [thread:$0]  %s114, 512, %s116, [#allocation14], 128, 128, 8
    $region57: #{tpu_custom_call.1} parent=1 // pred_fallthru
      _
    // Predicated region
    $region58: #{tpu_custom_call.1} parent=1 // pred_check
      _
    $region59: #{tpu_custom_call.1} parent=1 // pred_check_branch
      %123 = sbr.rel (0) target = $region61
    $region60: #{tpu_custom_call.1} parent=1 // pred_region
      _
    $region61: #{tpu_custom_call.1} parent=1 // pred_fallthru
      _
    // Predicated region
    $region62: #{tpu_custom_call.1} parent=1 // pred_check
      _
    $region63: #{tpu_custom_call.1} parent=1 // pred_check_branch
      %125 = sbr.rel (0) target = $region65
    $region64: #{tpu_custom_call.1} parent=1 // pred_region
      _
    $region65: #{tpu_custom_call.1} parent=1 // pred_fallthru
      _
    // Predicated region
    $region66: #{tpu_custom_call.1} parent=1 // pred_check
      _
    $region67: #{tpu_custom_call.1} parent=1 // pred_check_branch
      %127 = sbr.rel (0) target = $region69
    $region68: #{tpu_custom_call.1} parent=1 // pred_region
      _
    $region69: #{tpu_custom_call.1} parent=1 // pred_fallthru
      _
    // Predicated region
    $region70: #{tpu_custom_call.1} parent=1 // pred_check
      _
    $region71: #{tpu_custom_call.1} parent=1 // pred_check_branch
      %129 = sbr.rel (0) target = $region73
    $region72: #{tpu_custom_call.1} parent=1 // pred_region
      _
    $region73: #{tpu_custom_call.1} parent=1 // pred_fallthru
      _
    // Predicated region
    $region74: #{tpu_custom_call.1} parent=1 // pred_check
      _
    $region75: #{tpu_custom_call.1} parent=1 // pred_check_branch
      %131 = sbr.rel (0) target = $region77
    $region76: #{tpu_custom_call.1} parent=1 // pred_region
      _
    $region77: #{tpu_custom_call.1} parent=1 // pred_fallthru
      _
    // Predicated region
    $region78: #{tpu_custom_call.1} parent=1 // pred_check
      _
    $region79: #{tpu_custom_call.1} parent=1 // pred_check_branch
      %133 = sbr.rel (0) target = $region81
    $region80: #{tpu_custom_call.1} parent=1 // pred_region
      _
    $region81: #{tpu_custom_call.1} parent=1 // pred_fallthru
      _
    // Predicated region
    $region82: #{tpu_custom_call.1} parent=1 // pred_check
      _
    $region83: #{tpu_custom_call.1} parent=1 // pred_check_branch
      %135 = sbr.rel (0) target = $region85
    $region84: #{tpu_custom_call.1} parent=1 // pred_region
      %137 = dma.done [#allocation5], 256
    $region85: #{tpu_custom_call.1} parent=1 // pred_fallthru
      _
    // Predicated region
    $region86: #{tpu_custom_call.1} parent=1 // pred_check
      _
    $region87: #{tpu_custom_call.1} parent=1 // pred_check_branch
      %139 = sbr.rel (0) target = $region89
    $region88: #{tpu_custom_call.1} parent=1 // pred_region
      %141 = dma.done [#allocation8], 128
    $region89: #{tpu_custom_call.1} parent=1 // pred_fallthru
      _
    // Predicated region
    $region90: #{tpu_custom_call.1} parent=1 // pred_check
      _
    $region91: #{tpu_custom_call.1} parent=1 // pred_check_branch
      %143 = sbr.rel (0) target = $region93
    $region92: #{tpu_custom_call.1} parent=1 // pred_region
      %145 = dma.done [#allocation8], 256
    $region93: #{tpu_custom_call.1} parent=1 // pred_fallthru
      _
    // Predicated region
    $region94: #{tpu_custom_call.1} parent=1 // pred_check
      _
    $region95: #{tpu_custom_call.1} parent=1 // pred_check_branch
      %147 = sbr.rel (0) target = $region97
    $region96: #{tpu_custom_call.1} parent=1 // pred_region
      %149 = dma.done [#allocation11], 16
    $region97: #{tpu_custom_call.1} parent=1 // pred_fallthru
      _
    // Predicated region
    $region98: #{tpu_custom_call.1} parent=1 // pred_check
      _
    $region99: #{tpu_custom_call.1} parent=1 // pred_check_branch
      %151 = sbr.rel (0) target = $region101
    $region100: #{tpu_custom_call.1} parent=1 // pred_region
      %153 = dma.done [#allocation11], 512
    $region101: #{tpu_custom_call.1} parent=1 // pred_fallthru
      _
    // Predicated region
    $region102: #{tpu_custom_call.1} parent=1 // pred_check
      _
    $region103: #{tpu_custom_call.1} parent=1 // pred_check_branch
      %155 = sbr.rel (0) target = $region105
    $region104: #{tpu_custom_call.1} parent=1 // pred_region
      %157 = dma.done [#allocation14], 512
    $region105: #{tpu_custom_call.1} parent=1 // pred_fallthru
      _
    %v159 = vld [vmem:[%s0] sm:$0xf]
    %v160 = vld [vmem:[%s0 + $0x4] sm:$0xf]
    %v161 = vld [vmem:[%s1] sm:$0x3f]
    %v162 = vld [vmem:[#allocation7] sm:$0xff]
    %vm163 = vcmask 64512
    %v165 = vsel %vm163, %v161, 0
    %167 = vmatpush.msra.mxu0 0.0
    %168 = vmatpush.msra.mxu0 0.0
    %169 = vmatpush.msra.mxu0 0.0
    %170 = vmatpush.msra.mxu0 0.0
    %171 = vmatpush.msra.mxu0 0.0
    %172 = vmatpush.msra.mxu0 0.0
    %173 = vmatpush.msra.mxu0 0.0
    %174 = vmatpush.msra.mxu0 0.0
    %175 = vmatpush.msra.mxu0 0.0
    %176 = vmatpush.msra.mxu0 0.0
    %177 = vmatpush.msra.mxu0 0.0
    %178 = vmatpush.msra.mxu0 0.0
    %179 = vmatpush.msra.mxu0 0.0
    %180 = vmatpush.msra.mxu0 0.0
    %181 = vmatpush.msra.mxu0 0.0
    %182 = vmatpush.msra.mxu0 %v162
    %183 = vmatmul.f32.gmra.mxu0 %v165
    %v184 = vpop.f32.mrf.mxu0
    %v185 = vadd.f32 0.0, %v184
    %186 = vdwg.mxu0
    %vm187 = vcmask 259072
    %188 = vst.msk [vmem:[#allocation2] sm:$0x3f] %vm187, %v185
    %v189 = vld [vmem:[#allocation4] sm:$0xff]
    %v190 = vld [vmem:[#allocation4 + $0x8] sm:$0x3]
    %v191 = vld [vmem:[#allocation9] sm:$0xff]
    %v192 = vld [vmem:[#allocation9 + $0x8] sm:$0xf]
    %vm193 = vcmask 97280
    %v195 = vsel %vm193, %v189, 0
    %v198 = vsel %vm193, %v190, 0
    %vm200 = vcmask 1043456
    %v202 = vsel %vm200, %v192, 0
    %204 = vmatpush.msra.mxu0 0.0
    %205 = vmatpush.msra.mxu0 0.0
    %206 = vmatpush.msra.mxu0 0.0
    %207 = vmatpush.msra.mxu0 0.0
    %208 = vmatpush.msra.mxu0 0.0
    %209 = vmatpush.msra.mxu0 0.0
    %210 = vmatpush.msra.mxu0 0.0
    %211 = vmatpush.msra.mxu0 0.0
    %212 = vmatpush.msra.mxu0 0.0
    %213 = vmatpush.msra.mxu0 0.0
    %214 = vmatpush.msra.mxu0 0.0
    %215 = vmatpush.msra.mxu0 0.0
    %216 = vmatpush.msra.mxu0 0.0
    %217 = vmatpush.msra.mxu0 0.0
    %218 = vmatpush.msra.mxu0 %v202
    %219 = vmatpush.msra.mxu0 %v191
    %220 = vmatmul.f32.gmra.mxu0 %v195
    %v221 = vpop.f32.mrf.mxu0
    %v222 = vadd.f32 0.0, %v221
    %223 = vmatmul.f32.gmra.mxu0 %v198
    %v224 = vpop.f32.mrf.mxu0
    %v225 = vadd.f32 0.0, %v224
    %226 = vdwg.mxu0
    %vm227 = vcmask 261120
    %228 = vst.msk [vmem:[#allocation2 + $0x6] sm:$0xff] %vm227, %v222
    %vm229 = vcmask 254976
    %230 = vst.msk [vmem:[#allocation2 + $0xe] sm:$0x3] %vm229, %v225
    %v231 = vld [vmem:[#allocation2] sm:$0xff]
    %v232 = vld [vmem:[#allocation2 + $0x8] sm:$0xff]
    %v233 = vpack.c.bf16 %v232, %v231
    %v236 = vunpack.c.l.b16 %v159
    %v237 = vunpack.c.l.b16 %v160
    %v238 = vpack.c.b16 %v237, %v236
    %vm239 = vcmask 130048
    %v241 = vsel %vm239, %v238, 0
    %243 = vmatpush.bf16.msra.mxu0 0
    %244 = vmatpush.bf16.msra.mxu0 0
    %245 = vmatpush.bf16.msra.mxu0 0
    %246 = vmatpush.bf16.msra.mxu0 0
    %247 = vmatpush.bf16.msra.mxu0 0
    %248 = vmatpush.bf16.msra.mxu0 0
    %249 = vmatpush.bf16.msra.mxu0 0
    %250 = vmatpush.bf16.msra.mxu0 %v233
    %251 = vmatmul.bf16.gmra.mxu0 %v241
    %v252 = vpop.f32.mrf.mxu0
    %v253 = vadd.f32 0.0, %v252
    %v254 = vpop.f32.mrf.mxu0
    %v255 = vadd.f32 0.0, %v254
    %256 = vdwg.mxu0
    %v257 = vadd.f32 %v231, %v253
    %v258 = vadd.f32 %v232, %v255
    %v259 = vpack.c.bf16 %v255, %v253
    %260 = vmatpush.bf16.msra.mxu0 0
    %261 = vmatpush.bf16.msra.mxu0 0
    %262 = vmatpush.bf16.msra.mxu0 0
    %263 = vmatpush.bf16.msra.mxu0 0
    %264 = vmatpush.bf16.msra.mxu0 0
    %265 = vmatpush.bf16.msra.mxu0 0
    %266 = vmatpush.bf16.msra.mxu0 0
    %267 = vmatpush.bf16.msra.mxu0 %v259
    %268 = vmatmul.bf16.gmra.mxu0 %v241
    %v269 = vpop.f32.mrf.mxu0
    %v270 = vadd.f32 0.0, %v269
    %v271 = vpop.f32.mrf.mxu0
    %v272 = vadd.f32 0.0, %v271
    %273 = vdwg.mxu0
    %v274 = vadd.f32 %v257, %v270
    %v275 = vadd.f32 %v258, %v272
    %v276 = vpack.c.bf16 %v272, %v270
    %277 = vmatpush.bf16.msra.mxu0 0
    %278 = vmatpush.bf16.msra.mxu0 0
    %279 = vmatpush.bf16.msra.mxu0 0
    %280 = vmatpush.bf16.msra.mxu0 0
    %281 = vmatpush.bf16.msra.mxu0 0
    %282 = vmatpush.bf16.msra.mxu0 0
    %283 = vmatpush.bf16.msra.mxu0 0
    %284 = vmatpush.bf16.msra.mxu0 %v276
    %285 = vmatmul.bf16.gmra.mxu0 %v241
    %v286 = vpop.f32.mrf.mxu0
    %v287 = vadd.f32 0.0, %v286
    %v288 = vpop.f32.mrf.mxu0
    %v289 = vadd.f32 0.0, %v288
    %290 = vdwg.mxu0
    %v291 = vadd.f32 %v274, %v287
    %v292 = vadd.f32 %v275, %v289
    %v293 = vmul.f32 %v291, 0.125
    %v294 = vmul.f32 %v292, 0.125
    %v295 = vld [vmem:[%s5] sm:$0xff]
    %v296 = vld [vmem:[%s5 + $0x8] sm:$0xff]
    %v297 = vld [vmem:[%s5 + $0x10] sm:$0xff]
    %v298 = vld [vmem:[%s5 + $0x18] sm:$0xff]
    %v300 = vsel %vm227, %v293, 0
    %v303 = vsel %vm227, %v294, 0
    %305 = vmatpush.msra.mxu0 0.0
    %306 = vmatpush.msra.mxu0 0.0
    %307 = vmatpush.msra.mxu0 0.0
    %308 = vmatpush.msra.mxu0 0.0
    %309 = vmatpush.msra.mxu0 0.0
    %310 = vmatpush.msra.mxu0 0.0
    %311 = vmatpush.msra.mxu0 0.0
    %312 = vmatpush.msra.mxu0 0.0
    %313 = vmatpush.msra.mxu0 0.0
    %314 = vmatpush.msra.mxu0 0.0
    %315 = vmatpush.msra.mxu0 0.0
    %316 = vmatpush.msra.mxu0 0.0
    %317 = vmatpush.msra.mxu0 %v298
    %318 = vmatpush.msra.mxu0 %v297
    %319 = vmatpush.msra.mxu0 %v296
    %320 = vmatpush.msra.mxu0 %v295
    %321 = vmatmul.f32.gmra.mxu0 %v300
    %v322 = vpop.f32.mrf.mxu0
    %v323 = vadd.f32 0.0, %v322
    %324 = vmatmul.f32.gmra.mxu0 %v303
    %v325 = vpop.f32.mrf.mxu0
    %v326 = vadd.f32 0.0, %v325
    %327 = vdwg.mxu0
    %v328 = vpack.c.bf16 %v326, %v323
    %v329 = vld [vmem:[%s6] sm:$0x1]
    %v331 = vperm.slane %v329, 0
    %333 = vmatpush.bf16.msra.mxu0 0
    %334 = vmatpush.bf16.msra.mxu0 0
    %335 = vmatpush.bf16.msra.mxu0 0
    %336 = vmatpush.bf16.msra.mxu0 0
    %337 = vmatpush.bf16.msra.mxu0 0
    %338 = vmatpush.bf16.msra.mxu0 0
    %339 = vmatpush.bf16.msra.mxu0 0
    %340 = vmatpush.bf16.msra.mxu0 %v328
    %341 = vmatmul.bf16.gmra.mxu0 %v241
    %v342 = vpop.f32.mrf.mxu0
    %v343 = vadd.f32 %v331, %v342
    %v344 = vpop.f32.mrf.mxu0
    %v345 = vadd.f32 %v331, %v344
    %346 = vdwg.mxu0
    %v347 = vld [vmem:[%s7] sm:$0xff]
    %v348 = vld [vmem:[%s7 + $0x8] sm:$0xff]
    %v349 = vld [vmem:[%s7 + $0x10] sm:$0xff]
    %v350 = vld [vmem:[%s7 + $0x18] sm:$0xff]
    %v352 = vsel %vm227, %v343, 0
    %v355 = vsel %vm227, %v345, 0
    %357 = vmatpush.msra.mxu0 0.0
    %358 = vmatpush.msra.mxu0 0.0
    %359 = vmatpush.msra.mxu0 0.0
    %360 = vmatpush.msra.mxu0 0.0
    %361 = vmatpush.msra.mxu0 0.0
    %362 = vmatpush.msra.mxu0 0.0
    %363 = vmatpush.msra.mxu0 0.0
    %364 = vmatpush.msra.mxu0 0.0
    %365 = vmatpush.msra.mxu0 0.0
    %366 = vmatpush.msra.mxu0 0.0
    %367 = vmatpush.msra.mxu0 0.0
    %368 = vmatpush.msra.mxu0 0.0
    %369 = vmatpush.msra.mxu0 %v350
    %370 = vmatpush.msra.mxu0 %v349
    %371 = vmatpush.msra.mxu0 %v348
    %372 = vmatpush.msra.mxu0 %v347
    %373 = vmatmul.f32.gmra.mxu0 %v352
    %v374 = vpop.f32.mrf.mxu0
    %v375 = vadd.f32 0.0, %v374
    %376 = vmatmul.f32.gmra.mxu0 %v355
    %v377 = vpop.f32.mrf.mxu0
    %v378 = vadd.f32 0.0, %v377
    %379 = vdwg.mxu0
    %v380 = vpack.c.bf16 %v378, %v375
    %v381 = vld [vmem:[#allocation10] sm:$0x1]
    %v383 = vperm.slane %v381, 0
    %385 = vmatpush.bf16.msra.mxu0 0
    %386 = vmatpush.bf16.msra.mxu0 0
    %387 = vmatpush.bf16.msra.mxu0 0
    %388 = vmatpush.bf16.msra.mxu0 0
    %389 = vmatpush.bf16.msra.mxu0 0
    %390 = vmatpush.bf16.msra.mxu0 0
    %391 = vmatpush.bf16.msra.mxu0 0
    %392 = vmatpush.bf16.msra.mxu0 %v380
    %393 = vmatmul.bf16.gmra.mxu0 %v241
    %v394 = vpop.f32.mrf.mxu0
    %v395 = vadd.f32 %v383, %v394
    %v396 = vpop.f32.mrf.mxu0
    %v397 = vadd.f32 %v383, %v396
    %398 = vdwg.mxu0
    %vm399 = vcmask 31744
    %v400 = vsel %vm399, %v395, -inf
    %401 = vmax.xlane.f32.xlu0 %v400
    %v402 = vpop.xlane.xlu0 %401
    %v403 = vsel %vm399, %v397, -inf
    %404 = vmax.xlane.f32.xlu0 %v403
    %v405 = vpop.xlane.xlu0 %404
    %v406 = vsub.f32 %v395, %v402
    %v407 = vsub.f32 %v397, %v405
    %v408 = vmul.f32 %v406, 1.442695
    %v409 = vpow.pop %v408
    %v410 = vmul.f32 %v407, 1.442695
    %v411 = vpow.pop %v410
    %v412 = vsel %vm399, %v409, 0.0
    %413 = vadd.xlane.f32.xlu0 %v412
    %v414 = vpop.xlane.xlu0 %413
    %v415 = vsel %vm399, %v411, 0.0
    %416 = vadd.xlane.f32.xlu0 %v415
    %v417 = vpop.xlane.xlu0 %416
    %v418 = vlog2.pop %v414
    %v419 = vmul.f32 %v418, 0.6931472
    %v420 = vlog2.pop %v417
    %v421 = vmul.f32 %v420, 0.6931472
    %v422 = vsub.f32 %v406, %v419
    %v423 = vsub.f32 %v407, %v421
    %v424 = vlaneseq
    %v425 = vand.u32 %v424, 127
    %v426 = vld [vmem:[%s18] sm:$0xff]
    %427 = vset.pattern.permute.xlu0 0
    %428 = vperm.xlu0 %427, %v426
    %v429 = vpop.permute.xlu0 %428
    %vm430 = vcmp.eq.s32.totalorder %v425, %v429
    %v431 = vsel %vm430, 1, 0
    %v432 = vcvt.s32.f32 %v431
    %v433 = vpack.c.bf16 %v432, %v432
    %v434 = vld [vmem:[%s19] sm:$0xff]
    %435 = vset.pattern.permute.xlu0 0
    %436 = vperm.xlu0 %435, %v434
    %v437 = vpop.permute.xlu0 %436
    %vm438 = vcmp.eq.s32.totalorder %v425, %v437
    %v439 = vsel %vm438, 1, 0
    %v440 = vcvt.s32.f32 %v439
    %v441 = vpack.c.bf16 %v440, %v440
    %v442 = vpack.c.bf16 %v423, %v422
    %v444 = vsel %vm239, %v433, 0
    %446 = vmatpush.bf16.msra.mxu0 0
    %447 = vmatpush.bf16.msra.mxu0 0
    %448 = vmatpush.bf16.msra.mxu0 0
    %449 = vmatpush.bf16.msra.mxu0 0
    %450 = vmatpush.bf16.msra.mxu0 0
    %451 = vmatpush.bf16.msra.mxu0 0
    %452 = vmatpush.bf16.msra.mxu0 0
    %453 = vmatpush.bf16.msra.mxu0 %v442
    %454 = vmatmul.bf16.gmra.mxu0 %v444
    %v455 = vpop.f32.mrf.mxu0
    %v456 = vadd.f32 0.0, %v455
    %v457 = vpop.f32.mrf.mxu0
    %458 = vdwg.mxu0
    %459 = vmatpush.bf16.msra.mxu0 0
    %460 = vmatpush.bf16.msra.mxu0 0
    %461 = vmatpush.bf16.msra.mxu0 0
    %462 = vmatpush.bf16.msra.mxu0 0
    %463 = vmatpush.bf16.msra.mxu0 0
    %464 = vmatpush.bf16.msra.mxu0 0
    %465 = vmatpush.bf16.msra.mxu0 0
    %466 = vmatpush.bf16.msra.mxu0 %v233
    %467 = vmatmul.bf16.gmra.mxu0 %v444
    %v468 = vpop.f32.mrf.mxu0
    %v469 = vadd.f32 0.0, %v468
    %v470 = vpop.f32.mrf.mxu0
    %471 = vdwg.mxu0
    %v473 = vsel %vm239, %v441, 0
    %475 = vmatpush.bf16.msra.mxu0 0
    %476 = vmatpush.bf16.msra.mxu0 0
    %477 = vmatpush.bf16.msra.mxu0 0
    %478 = vmatpush.bf16.msra.mxu0 0
    %479 = vmatpush.bf16.msra.mxu0 0
    %480 = vmatpush.bf16.msra.mxu0 0
    %481 = vmatpush.bf16.msra.mxu0 0
    %482 = vmatpush.bf16.msra.mxu0 %v442
    %483 = vmatmul.bf16.gmra.mxu0 %v473
    %v484 = vpop.f32.mrf.mxu0
    %v485 = vadd.f32 0.0, %v484
    %v486 = vpop.f32.mrf.mxu0
    %487 = vdwg.mxu0
    %488 = vmatpush.bf16.msra.mxu0 0
    %489 = vmatpush.bf16.msra.mxu0 0
    %490 = vmatpush.bf16.msra.mxu0 0
    %491 = vmatpush.bf16.msra.mxu0 0
    %492 = vmatpush.bf16.msra.mxu0 0
    %493 = vmatpush.bf16.msra.mxu0 0
    %494 = vmatpush.bf16.msra.mxu0 0
    %495 = vmatpush.bf16.msra.mxu0 %v233
    %496 = vmatmul.bf16.gmra.mxu0 %v473
    %v497 = vpop.f32.mrf.mxu0
    %v498 = vadd.f32 0.0, %v497
    %v499 = vpop.f32.mrf.mxu0
    %500 = vdwg.mxu0
    %v501 = vld [vmem:[%s9] sm:$0xf]
    %v502 = vld [vmem:[#allocation12] sm:$0xff]
    %v503 = vld [vmem:[#allocation12 + $0x8] sm:$0xff]
    %v504 = vld [vmem:[#allocation12 + $0x10] sm:$0xff]
    %v505 = vld [vmem:[#allocation12 + $0x18] sm:$0xff]
    %v507 = vsel %vm227, %v469, 0
    %509 = vmatpush.msra.mxu0 0.0
    %510 = vmatpush.msra.mxu0 0.0
    %511 = vmatpush.msra.mxu0 0.0
    %512 = vmatpush.msra.mxu0 0.0
    %513 = vmatpush.msra.mxu0 0.0
    %514 = vmatpush.msra.mxu0 0.0
    %515 = vmatpush.msra.mxu0 0.0
    %516 = vmatpush.msra.mxu0 0.0
    %517 = vmatpush.msra.mxu0 0.0
    %518 = vmatpush.msra.mxu0 0.0
    %519 = vmatpush.msra.mxu0 0.0
    %520 = vmatpush.msra.mxu0 0.0
    %521 = vmatpush.msra.mxu0 %v505
    %522 = vmatpush.msra.mxu0 %v504
    %523 = vmatpush.msra.mxu0 %v503
    %524 = vmatpush.msra.mxu0 %v502
    %525 = vmatmul.f32.gmra.mxu0 %v507
    %v526 = vpop.f32.mrf.mxu0
    %v527 = vadd.f32 0.0, %v526
    %528 = vdwg.mxu0
    %v530 = vsel %vm399, %v456, 0
    %v533 = vsel %vm200, %v501, 0
    %535 = vmatpush.msra.mxu0 0.0
    %536 = vmatpush.msra.mxu0 0.0
    %537 = vmatpush.msra.mxu0 0.0
    %538 = vmatpush.msra.mxu0 0.0
    %539 = vmatpush.msra.mxu0 0.0
    %540 = vmatpush.msra.mxu0 0.0
    %541 = vmatpush.msra.mxu0 0.0
    %542 = vmatpush.msra.mxu0 0.0
    %543 = vmatpush.msra.mxu0 0.0
    %544 = vmatpush.msra.mxu0 0.0
    %545 = vmatpush.msra.mxu0 0.0
    %546 = vmatpush.msra.mxu0 0.0
    %547 = vmatpush.msra.mxu0 0.0
    %548 = vmatpush.msra.mxu0 0.0
    %549 = vmatpush.msra.mxu0 0.0
    %550 = vmatpush.msra.mxu0 %v533
    %551 = vmatmul.f32.gmra.mxu0 %v530
    %v552 = vpop.f32.mrf.mxu0
    %v553 = vadd.f32 %v527, %v552
    %554 = vdwg.mxu0
    %v555 = vld [vmem:[%s11] sm:$0x1]
    %v557 = vperm.slane %v555, 0
    %v559 = vadd.f32 %v553, %v557
    %vm560 = vcmp.gt.f32.partialorder %v559, 0.0
    %v561 = vmin.f32 %v559, 0.0
    %v562 = vmul.f32 %v561, 1.442695
    %v563 = vpow.pop %v562
    %v564 = vsub.f32 %v563, 1.0
    %v565 = vsel %vm560, %v559, %v564
    %v566 = vld [vmem:[%s12] sm:$0xf]
    %v567 = vld [vmem:[#allocation13] sm:$0xff]
    %v568 = vld [vmem:[#allocation13 + $0x8] sm:$0xff]
    %v569 = vld [vmem:[#allocation13 + $0x10] sm:$0xff]
    %v570 = vld [vmem:[#allocation13 + $0x18] sm:$0xff]
    %v572 = vsel %vm227, %v498, 0
    %574 = vmatpush.msra.mxu0 0.0
    %575 = vmatpush.msra.mxu0 0.0
    %576 = vmatpush.msra.mxu0 0.0
    %577 = vmatpush.msra.mxu0 0.0
    %578 = vmatpush.msra.mxu0 0.0
    %579 = vmatpush.msra.mxu0 0.0
    %580 = vmatpush.msra.mxu0 0.0
    %581 = vmatpush.msra.mxu0 0.0
    %582 = vmatpush.msra.mxu0 0.0
    %583 = vmatpush.msra.mxu0 0.0
    %584 = vmatpush.msra.mxu0 0.0
    %585 = vmatpush.msra.mxu0 0.0
    %586 = vmatpush.msra.mxu0 %v570
    %587 = vmatpush.msra.mxu0 %v569
    %588 = vmatpush.msra.mxu0 %v568
    %589 = vmatpush.msra.mxu0 %v567
    %590 = vmatmul.f32.gmra.mxu0 %v572
    %v591 = vpop.f32.mrf.mxu0
    %v592 = vadd.f32 0.0, %v591
    %593 = vdwg.mxu0
    %v595 = vsel %vm399, %v485, 0
    %v598 = vsel %vm200, %v566, 0
    %600 = vmatpush.msra.mxu0 0.0
    %601 = vmatpush.msra.mxu0 0.0
    %602 = vmatpush.msra.mxu0 0.0
    %603 = vmatpush.msra.mxu0 0.0
    %604 = vmatpush.msra.mxu0 0.0
    %605 = vmatpush.msra.mxu0 0.0
    %606 = vmatpush.msra.mxu0 0.0
    %607 = vmatpush.msra.mxu0 0.0
    %608 = vmatpush.msra.mxu0 0.0
    %609 = vmatpush.msra.mxu0 0.0
    %610 = vmatpush.msra.mxu0 0.0
    %611 = vmatpush.msra.mxu0 0.0
    %612 = vmatpush.msra.mxu0 0.0
    %613 = vmatpush.msra.mxu0 0.0
    %614 = vmatpush.msra.mxu0 0.0
    %615 = vmatpush.msra.mxu0 %v598
    %616 = vmatmul.f32.gmra.mxu0 %v595
    %v617 = vpop.f32.mrf.mxu0
    %v618 = vadd.f32 %v592, %v617
    %619 = vdwg.mxu0
    %v620 = vld [vmem:[%s14] sm:$0x1]
    %v622 = vperm.slane %v620, 0
    %v624 = vadd.f32 %v618, %v622
    %vm625 = vcmp.gt.f32.partialorder %v624, 0.0
    %v626 = vmin.f32 %v624, 0.0
    %v627 = vmul.f32 %v626, 1.442695
    %v628 = vpow.pop %v627
    %v629 = vsub.f32 %v628, 1.0
    %v630 = vsel %vm625, %v624, %v629
    %v631 = vld [vmem:[%s15] sm:$0x1]
    %v632 = vld [vmem:[%s16] sm:$0x1]
    %v634 = vsel %vm227, %v632, 0
    %v637 = vsel %vm227, %v630, 0
    %639 = vmatpush.xpose.msra.mxu0 0.0
    %640 = vmatpush.xpose.msra.mxu0 0.0
    %641 = vmatpush.xpose.msra.mxu0 0.0
    %642 = vmatpush.xpose.msra.mxu0 0.0
    %643 = vmatpush.xpose.msra.mxu0 0.0
    %644 = vmatpush.xpose.msra.mxu0 0.0
    %645 = vmatpush.xpose.msra.mxu0 0.0
    %646 = vmatpush.xpose.msra.mxu0 0.0
    %647 = vmatpush.xpose.msra.mxu0 0.0
    %648 = vmatpush.xpose.msra.mxu0 0.0
    %649 = vmatpush.xpose.msra.mxu0 0.0
    %650 = vmatpush.xpose.msra.mxu0 0.0
    %651 = vmatpush.xpose.msra.mxu0 0.0
    %652 = vmatpush.xpose.msra.mxu0 0.0
    %653 = vmatpush.xpose.msra.mxu0 0.0
    %654 = vmatpush.xpose.msra.mxu0 %v637
    %655 = vmatmul.f32.gmra.mxu0 %v634
    %v656 = vpop.f32.mrf.mxu0
    %v657 = vadd.f32 0.0, %v656
    %658 = vdwg.mxu0
    %v660 = vsel %vm227, %v631, 0
    %v663 = vsel %vm227, %v565, 0
    %665 = vmatpush.xpose.msra.mxu0 0.0
    %666 = vmatpush.xpose.msra.mxu0 0.0
    %667 = vmatpush.xpose.msra.mxu0 0.0
    %668 = vmatpush.xpose.msra.mxu0 0.0
    %669 = vmatpush.xpose.msra.mxu0 0.0
    %670 = vmatpush.xpose.msra.mxu0 0.0
    %671 = vmatpush.xpose.msra.mxu0 0.0
    %672 = vmatpush.xpose.msra.mxu0 0.0
    %673 = vmatpush.xpose.msra.mxu0 0.0
    %674 = vmatpush.xpose.msra.mxu0 0.0
    %675 = vmatpush.xpose.msra.mxu0 0.0
    %676 = vmatpush.xpose.msra.mxu0 0.0
    %677 = vmatpush.xpose.msra.mxu0 0.0
    %678 = vmatpush.xpose.msra.mxu0 0.0
    %679 = vmatpush.xpose.msra.mxu0 0.0
    %680 = vmatpush.xpose.msra.mxu0 %v663
    %681 = vmatmul.f32.gmra.mxu0 %v660
    %v682 = vpop.f32.mrf.mxu0
    %v683 = vadd.f32 %v657, %v682
    %684 = vdwg.mxu0
    %v685 = vld [vmem:[#allocation3] sm:$0x1]
    %687 = vset.pattern.permute.xlu0 0
    %688 = vperm.xlu0 %687, %v685
    %v689 = vpop.permute.xlu0 %688
    %v691 = vperm.slane %v689, 0
    %v692 = vadd.f32 %v683, %v691
    %v693 = vsub.f32 0.0, %v692
    %v694 = vmul.f32 %v693, 1.442695
    %v695 = vpow.pop %v694
    %v696 = vadd.f32 %v695, 1.0
    %v697 = vrcp.pop %v696
    %vm698 = vcmask 57344
    %699 = vst.msk [vmem:[#allocation15] sm:$0x1] %vm698, %v697
    // Predicated region
    $region106: #{tpu_custom_call.1} parent=1 // pred_check
      _
    $region107: #{tpu_custom_call.1} parent=1 // pred_check_branch
      %701 = sbr.rel (0) target = $region109
    $region108: #{tpu_custom_call.1} parent=1 // pred_region
      %703 = vsyncadd [#allocation6], 0
      %s705 = sshll.u32 [#allocation15], 4
      %s706 = int_to_ptr.vmem [resolvable:$true] %s705
      %s707 = sshll.u32 %s20, 4
      %s708 = int_to_ptr.hbm [resolvable:$true] %s707
      %710 = dma.vmem_to_hbm [thread:$0]  %s706, 16, %s708, [#allocation6]
    $region109: #{tpu_custom_call.1} parent=1 // pred_fallthru
      _
    // Predicated region
    $region110: #{tpu_custom_call.1} parent=1 // pred_check
      _
    $region111: #{tpu_custom_call.1} parent=1 // pred_check_branch
      %712 = sbr.rel (0) target = $region113
    $region112: #{tpu_custom_call.1} parent=1 // pred_region
      %714 = dma.done [#allocation6], 16
    $region113: #{tpu_custom_call.1} parent=1 // pred_fallthru
      _
    %715 = vsyncpa [#allocation5], 1
    %716 = vsyncpa [#allocation8], 1
    %717 = vsyncpa [#allocation11], 1
    %718 = vsyncpa [#allocation14], 1
    %719 = vsyncpa [#allocation6], 1

</llo_original>
